<compile_context>
chip_gen: v6e
topology: v6e:2x2x1
jax: 0.10.0
libtpu: 0.0.40
codegen_flags: <defaults>
</compile_context>

<pallas_src>
import jax
import jax.numpy as jnp
from jax.experimental import pallas as pl
from jax.experimental.pallas import tpu as pltpu


def _fused_mlp_kernel(xn_ref, ridx_ref, sidx_ref,
                      w1a_ref, w1r_ref, w1s_ref, b1_ref,
                      w2_ref, b2_ref, w3_ref, b3_ref,
                      o_ref):
    """Fused feature-major kernel; activations are (features, TB), batch on lanes."""
    f32 = jnp.float32
    xn = xn_ref[...]                       # (4, TB)  numeric features, transposed
    ridx = ridx_ref[...]                   # (1, TB)  int32
    sidx = sidx_ref[...]                   # (1, TB)  int32
    rv = w1r_ref.shape[1]                  # region vocab
    sv = w1s_ref.shape[1]                  # strategy vocab
    tb = xn.shape[1]

    # One-hot selection matrices (vocab is tiny; built on the VPU).
    oh_r = (jax.lax.broadcasted_iota(jnp.int32, (rv, tb), 0) == ridx).astype(f32)
    oh_s = (jax.lax.broadcasted_iota(jnp.int32, (sv, tb), 0) == sidx).astype(f32)

    # Layer 1: concat-free. Embedding gather + layer-1 weight already fused
    # into (64, vocab) tables, so each categorical feature is ONE one-hot matmul.
    h1 = (jnp.dot(w1a_ref[...], xn, preferred_element_type=f32)
          + jnp.dot(w1r_ref[...], oh_r, preferred_element_type=f32)
          + jnp.dot(w1s_ref[...], oh_s, preferred_element_type=f32)
          + b1_ref[...])
    h1 = jnp.maximum(h1, 0.0)                                           # (64, TB)

    # Layer 2.
    h2 = jnp.dot(w2_ref[...], h1, preferred_element_type=f32) + b2_ref[...]
    h2 = jnp.maximum(h2, 0.0)                                           # (32, TB)

    # Layer 3 (out_features == 1): VPU multiply + XLU sublane-reduce, not a
    # 1-row MXU pass.
    logit = jnp.sum(h2 * w3_ref[...], axis=0, keepdims=True) + b3_ref[...]   # (1, TB)
    o_ref[...] = jax.nn.sigmoid(logit)                                  # lane-dense store


def _round_up(x, m):
    return ((x + m - 1) // m) * m


def sequential_attention_dnn_forward(params, x_num, region_idx, strategy_idx,
                                     *, batch_tile=2048):
    """Full forward pass. Only cheap layout plumbing (pad / transpose / slice) is
    done in the wrapper; gather + concat + MLP run inside the Pallas kernel."""
    f32 = jnp.float32
    B = x_num.shape[0]

    # Batch tile: multiple of 128 (lane-dense), capped at batch_tile.
    TB = min(batch_tile, _round_up(B, 128))
    B_pad = _round_up(B, TB)
    num_tiles = B_pad // TB

    # Batch-tiled operands in feature-major layout (padded rows use index 0 /
    # zeros; their outputs are computed and discarded).
    xn_t = jnp.zeros((4, B_pad), f32).at[:, :B].set(x_num.astype(f32).T)
    ridx = jnp.zeros((1, B_pad), jnp.int32).at[:, :B].set(
        region_idx.astype(jnp.int32)[None, :])
    sidx = jnp.zeros((1, B_pad), jnp.int32).at[:, :B].set(
        strategy_idx.astype(jnp.int32)[None, :])

    w1a, w1r, w1s, b1 = params["w1a"], params["w1r"], params["w1s"], params["b1"]
    w2, b2 = params["w2"], params["b2"]
    w3, b3 = params["w3"], params["b3"]

    col = lambda i: (0, i)   # batch-tiled operands: new tile each grid step
    pin = lambda i: (0, 0)   # weights: constant block -> DMA'd once, stay resident

    # Advisory cost estimate so XLA can schedule neighbors around the custom call.
    flops_per_row = 2 * (w1a.size + w1r.size + w1s.size + w2.size + w3.size)
    weight_bytes = sum(int(a.size) * a.dtype.itemsize
                       for a in (w1a, w1r, w1s, b1, w2, b2, w3, b3))
    cost = pl.CostEstimate(
        flops=int(flops_per_row * B_pad),
        transcendentals=int(B_pad),
        bytes_accessed=int(B_pad * (4 * 4 + 2 * 4 + 4) + weight_bytes))

    out = pl.pallas_call(
        _fused_mlp_kernel,
        out_shape=jax.ShapeDtypeStruct((1, B_pad), f32),
        grid=(num_tiles,),
        in_specs=[
            pl.BlockSpec((4, TB), col),       # x_num^T tile
            pl.BlockSpec((1, TB), col),       # region idx tile
            pl.BlockSpec((1, TB), col),       # strategy idx tile
            pl.BlockSpec(w1a.shape, pin),     # (64, 4)
            pl.BlockSpec(w1r.shape, pin),     # (64, RV)  W1 x region table (fused)
            pl.BlockSpec(w1s.shape, pin),     # (64, SV)  W1 x strategy table (fused)
            pl.BlockSpec(b1.shape, pin),      # (64, 1)
            pl.BlockSpec(w2.shape, pin),      # (32, 64)
            pl.BlockSpec(b2.shape, pin),      # (32, 1)
            pl.BlockSpec(w3.shape, pin),      # (32, 1)
            pl.BlockSpec(b3.shape, pin),      # (1, 1)
        ],
        out_specs=pl.BlockSpec((1, TB), col),  # lane-dense output tile
        compiler_params=pltpu.CompilerParams(
            dimension_semantics=("parallel",)),  # megacore sharding on v7x
        cost_estimate=cost,
    )(xn_t, ridx, sidx, w1a, w1r, w1s, b1, w2, b2, w3, b3)

    return out[0, :B].reshape(B, 1)


def init_params(key, region_vocab_size, strategy_vocab_size, embed_dim=8):
    """Parameter init mirroring the PyTorch module, stored in kernel-ready layout."""
    input_dim = 4 + 2 * embed_dim
    ks = jax.random.split(key, 8)

    def lin(kw, kb, fan_in, fan_out):
        bound = 1.0 / jnp.sqrt(jnp.asarray(fan_in, jnp.float32))
        w = jax.random.uniform(kw, (fan_out, fan_in), jnp.float32, -bound, bound)
        b = jax.random.uniform(kb, (fan_out, 1), jnp.float32, -bound, bound)
        return w, b

    region_embed = jax.random.normal(ks[0], (region_vocab_size, embed_dim), jnp.float32)
    strategy_embed = jax.random.normal(ks[1], (strategy_vocab_size, embed_dim), jnp.float32)
    w1, b1 = lin(ks[2], ks[3], input_dim, 64)   # (64, 20), (64, 1)
    w2, b2 = lin(ks[4], ks[5], 64, 32)          # (32, 64), (32, 1)
    w3, b3 = lin(ks[6], ks[7], 32, 1)           # (1, 32),  (1, 1)

    w1a = w1[:, :4]                              # numeric-feature slice
    w1b = w1[:, 4:4 + embed_dim]                 # region-embedding slice
    w1c = w1[:, 4 + embed_dim:]                  # strategy-embedding slice

    return {
        # Raw pieces (kept for the pure-JAX reference / trainability).
        "region_embed_t": region_embed.T,        # (E, RV)
        "strategy_embed_t": strategy_embed.T,    # (E, SV)
        "w1b": w1b, "w1c": w1c,
        # Kernel-ready: W1 split along the concat axis, with the embedding
        # tables algebraically folded into the categorical slices.
        "w1a": w1a,                              # (64, 4)
        "w1r": w1b @ region_embed.T,             # (64, RV)
        "w1s": w1c @ strategy_embed.T,           # (64, SV)
        "b1": b1,
        "w2": w2, "b2": b2,
        "w3": w3.T,          # (32, 1) column for the VPU final layer
        "b3": b3,            # (1, 1)
        # TODO(synk): self.attention_weights is defined but never used in forward(); omitted.
    }


def _reference_forward(params, x_num, region_idx, strategy_idx):
    """Pure-JAX reference matching the PyTorch encoder semantics."""
    reg = params["region_embed_t"].T[region_idx]            # (B, E)
    strat = params["strategy_embed_t"].T[strategy_idx]      # (B, E)
    w1 = jnp.concatenate([params["w1a"], params["w1b"], params["w1c"]], axis=1)
    x = jnp.concatenate([x_num, reg, strat], axis=1)         # (B, 4 + 2E)
    h1 = jnp.maximum(x @ w1.T + params["b1"].T, 0.0)
    h2 = jnp.maximum(h1 @ params["w2"].T + params["b2"].T, 0.0)
    return jax.nn.sigmoid(h2 @ params["w3"] + params["b3"])


if __name__ == "__main__":
    key = jax.random.PRNGKey(0)
    k_param, k_x, k_r, k_s = jax.random.split(key, 4)

    B = 8
    REGION_VOCAB = 10
    STRATEGY_VOCAB = 6
    EMBED_DIM = 8

    params = init_params(k_param, REGION_VOCAB, STRATEGY_VOCAB, EMBED_DIM)

    x_num = jax.random.normal(k_x, (B, 4), jnp.float32)
    region_idx = jax.random.randint(k_r, (B,), 0, REGION_VOCAB, dtype=jnp.int32)
    strategy_idx = jax.random.randint(k_s, (B,), 0, STRATEGY_VOCAB, dtype=jnp.int32)

    out = sequential_attention_dnn_forward(params, x_num, region_idx, strategy_idx)
    out = jax.block_until_ready(out)

    ref = _reference_forward(params, x_num, region_idx, strategy_idx)
    assert out.shape == (B, 1), out.shape
    assert jnp.allclose(out, ref, atol=1e-5, rtol=1e-5), (out, ref)

    print("KERNEL_OK")
</pallas_src>

<mosaic_0001>
module attributes {stable_mosaic.version = 11 : i64} {
  func.func @_fused_mlp_kernel(%arg0: i32, %arg1: memref<4x128xf32, #tpu.memory_space<vmem>>, %arg2: memref<1x128xi32, #tpu.memory_space<vmem>>, %arg3: memref<1x128xi32, #tpu.memory_space<vmem>>, %arg4: memref<64x4xf32, #tpu.memory_space<vmem>>, %arg5: memref<64x10xf32, #tpu.memory_space<vmem>>, %arg6: memref<64x6xf32, #tpu.memory_space<vmem>>, %arg7: memref<64x1xf32, #tpu.memory_space<vmem>>, %arg8: memref<32x64xf32, #tpu.memory_space<vmem>>, %arg9: memref<32x1xf32, #tpu.memory_space<vmem>>, %arg10: memref<32x1xf32, #tpu.memory_space<vmem>>, %arg11: memref<1x1xf32, #tpu.memory_space<vmem>>, %arg12: memref<1x128xf32, #tpu.memory_space<vmem>>) attributes {dimension_semantics = [#tpu.dimension_semantics<parallel>], iteration_bounds = array<i64: 1>, scalar_prefetch = 0 : i64, scratch_operands = 0 : i64, tpu.core_type = #tpu.core_type<tc>, window_params = [{transform_indices = @transform_0, window_bounds = array<i64: 4, 128>}, {transform_indices = @transform_1, window_bounds = array<i64: 1, 128>}, {transform_indices = @transform_2, window_bounds = array<i64: 1, 128>}, {pipeline_mode = #tpu.pipeline_mode<synchronous>, transform_indices = @transform_3, window_bounds = array<i64: 64, 4>}, {pipeline_mode = #tpu.pipeline_mode<synchronous>, transform_indices = @transform_4, window_bounds = array<i64: 64, 10>}, {pipeline_mode = #tpu.pipeline_mode<synchronous>, transform_indices = @transform_5, window_bounds = array<i64: 64, 6>}, {pipeline_mode = #tpu.pipeline_mode<synchronous>, transform_indices = @transform_6, window_bounds = array<i64: 64, 1>}, {pipeline_mode = #tpu.pipeline_mode<synchronous>, transform_indices = @transform_7, window_bounds = array<i64: 32, 64>}, {pipeline_mode = #tpu.pipeline_mode<synchronous>, transform_indices = @transform_8, window_bounds = array<i64: 32, 1>}, {pipeline_mode = #tpu.pipeline_mode<synchronous>, transform_indices = @transform_9, window_bounds = array<i64: 32, 1>}, {pipeline_mode = #tpu.pipeline_mode<synchronous>, transform_indices = @transform_10, window_bounds = array<i64: 1, 1>}, {transform_indices = @transform_11, window_bounds = array<i64: 1, 128>}]} {
    %c0 = arith.constant 0 : index
    %c0_0 = arith.constant 0 : index
    %0 = vector.load %arg1[%c0, %c0_0] : memref<4x128xf32, #tpu.memory_space<vmem>>, vector<4x128xf32>
    %c0_1 = arith.constant 0 : index
    %c0_2 = arith.constant 0 : index
    %1 = vector.load %arg2[%c0_1, %c0_2] : memref<1x128xi32, #tpu.memory_space<vmem>>, vector<1x128xi32>
    %c0_3 = arith.constant 0 : index
    %c0_4 = arith.constant 0 : index
    %2 = vector.load %arg3[%c0_3, %c0_4] : memref<1x128xi32, #tpu.memory_space<vmem>>, vector<1x128xi32>
    %3 = tpu.iota {dimensions = array<i32: 0>} : vector<10x128xi32>
    %4 = vector.broadcast %1 : vector<1x128xi32> to vector<10x128xi32>
    %5 = arith.cmpi eq, %3, %4 : vector<10x128xi32>
    %6 = arith.extui %5 : vector<10x128xi1> to vector<10x128xi32>
    %7 = arith.sitofp %6 : vector<10x128xi32> to vector<10x128xf32>
    %8 = tpu.iota {dimensions = array<i32: 0>} : vector<6x128xi32>
    %9 = vector.broadcast %2 : vector<1x128xi32> to vector<6x128xi32>
    %10 = arith.cmpi eq, %8, %9 : vector<6x128xi32>
    %11 = arith.extui %10 : vector<6x128xi1> to vector<6x128xi32>
    %12 = arith.sitofp %11 : vector<6x128xi32> to vector<6x128xf32>
    %c0_5 = arith.constant 0 : index
    %c0_6 = arith.constant 0 : index
    %13 = vector.load %arg4[%c0_5, %c0_6] : memref<64x4xf32, #tpu.memory_space<vmem>>, vector<64x4xf32>
    %cst = arith.constant dense<0.000000e+00> : vector<64x128xf32>
    %14 = tpu.matmul %13, %0, %cst {dimension_numbers = #tpu.dot_dimension_numbers<[1], [0], [0], [1], [0, 0, 1, 1], [], []>} : vector<64x4xf32>, vector<4x128xf32>, vector<64x128xf32> -> vector<64x128xf32>
    %c0_7 = arith.constant 0 : index
    %c0_8 = arith.constant 0 : index
    %15 = vector.load %arg5[%c0_7, %c0_8] : memref<64x10xf32, #tpu.memory_space<vmem>>, vector<64x10xf32>
    %cst_9 = arith.constant dense<0.000000e+00> : vector<64x128xf32>
    %16 = tpu.matmul %15, %7, %cst_9 {dimension_numbers = #tpu.dot_dimension_numbers<[1], [0], [0], [1], [0, 0, 1, 1], [], []>} : vector<64x10xf32>, vector<10x128xf32>, vector<64x128xf32> -> vector<64x128xf32>
    %17 = arith.addf %14, %16 : vector<64x128xf32>
    %c0_10 = arith.constant 0 : index
    %c0_11 = arith.constant 0 : index
    %18 = vector.load %arg6[%c0_10, %c0_11] : memref<64x6xf32, #tpu.memory_space<vmem>>, vector<64x6xf32>
    %cst_12 = arith.constant dense<0.000000e+00> : vector<64x128xf32>
    %19 = tpu.matmul %18, %12, %cst_12 {dimension_numbers = #tpu.dot_dimension_numbers<[1], [0], [0], [1], [0, 0, 1, 1], [], []>} : vector<64x6xf32>, vector<6x128xf32>, vector<64x128xf32> -> vector<64x128xf32>
    %20 = arith.addf %17, %19 : vector<64x128xf32>
    %c0_13 = arith.constant 0 : index
    %c0_14 = arith.constant 0 : index
    %21 = vector.load %arg7[%c0_13, %c0_14] : memref<64x1xf32, #tpu.memory_space<vmem>>, vector<64x1xf32>
    %22 = vector.broadcast %21 : vector<64x1xf32> to vector<64x128xf32>
    %23 = arith.addf %20, %22 : vector<64x128xf32>
    %cst_15 = arith.constant 0.000000e+00 : f32
    %24 = vector.broadcast %cst_15 : f32 to vector<64x128xf32>
    %25 = arith.maximumf %23, %24 : vector<64x128xf32>
    %c0_16 = arith.constant 0 : index
    %c0_17 = arith.constant 0 : index
    %26 = vector.load %arg8[%c0_16, %c0_17] : memref<32x64xf32, #tpu.memory_space<vmem>>, vector<32x64xf32>
    %cst_18 = arith.constant dense<0.000000e+00> : vector<32x128xf32>
    %27 = tpu.matmul %26, %25, %cst_18 {dimension_numbers = #tpu.dot_dimension_numbers<[1], [0], [0], [1], [0, 0, 1, 1], [], []>} : vector<32x64xf32>, vector<64x128xf32>, vector<32x128xf32> -> vector<32x128xf32>
    %c0_19 = arith.constant 0 : index
    %c0_20 = arith.constant 0 : index
    %28 = vector.load %arg9[%c0_19, %c0_20] : memref<32x1xf32, #tpu.memory_space<vmem>>, vector<32x1xf32>
    %29 = vector.broadcast %28 : vector<32x1xf32> to vector<32x128xf32>
    %30 = arith.addf %27, %29 : vector<32x128xf32>
    %cst_21 = arith.constant 0.000000e+00 : f32
    %31 = vector.broadcast %cst_21 : f32 to vector<32x128xf32>
    %32 = arith.maximumf %30, %31 : vector<32x128xf32>
    %c0_22 = arith.constant 0 : index
    %c0_23 = arith.constant 0 : index
    %33 = vector.load %arg10[%c0_22, %c0_23] : memref<32x1xf32, #tpu.memory_space<vmem>>, vector<32x1xf32>
    %34 = vector.broadcast %33 : vector<32x1xf32> to vector<32x128xf32>
    %35 = arith.mulf %32, %34 : vector<32x128xf32>
    %cst_24 = arith.constant dense<0.000000e+00> : vector<128xf32>
    %36 = vector.multi_reduction <add>, %35, %cst_24 [0] : vector<32x128xf32> to vector<128xf32>
    %37 = vector.shape_cast %36 : vector<128xf32> to vector<1x128xf32>
    %c0_25 = arith.constant 0 : index
    %c0_26 = arith.constant 0 : index
    %38 = vector.load %arg11[%c0_25, %c0_26] : memref<1x1xf32, #tpu.memory_space<vmem>>, vector<1x1xf32>
    %39 = vector.broadcast %38 : vector<1x1xf32> to vector<1x128xf32>
    %40 = arith.addf %37, %39 : vector<1x128xf32>
    %41 = arith.negf %40 : vector<1x128xf32>
    %42 = math.exp %41 : vector<1x128xf32>
    %cst_27 = arith.constant 1.000000e+00 : f32
    %43 = vector.broadcast %cst_27 : f32 to vector<1x128xf32>
    %44 = arith.addf %43, %42 : vector<1x128xf32>
    %45 = arith.divf %43, %44 : vector<1x128xf32>
    %c0_28 = arith.constant 0 : index
    %c0_29 = arith.constant 0 : index
    %46 = vector.load %arg12[%c0_28, %c0_29] : memref<1x128xf32, #tpu.memory_space<vmem>>, vector<1x128xf32>
    tpu.vector_store %arg12[%c0_28, %c0_29], %45 {strides = array<i32>} : memref<1x128xf32, #tpu.memory_space<vmem>>, vector<1x128xf32>,
    return
  }
  func.func @transform_0(%arg0: i32) -> (i32, i32) {
    %c0_i32 = arith.constant 0 : i32
    %c0_i32_0 = arith.constant 0 : i32
    return %c0_i32, %arg0 : i32, i32
  }
  func.func @transform_1(%arg0: i32) -> (i32, i32) {
    %c0_i32 = arith.constant 0 : i32
    %c0_i32_0 = arith.constant 0 : i32
    return %c0_i32, %arg0 : i32, i32
  }
  func.func @transform_2(%arg0: i32) -> (i32, i32) {
    %c0_i32 = arith.constant 0 : i32
    %c0_i32_0 = arith.constant 0 : i32
    return %c0_i32, %arg0 : i32, i32
  }
  func.func @transform_3(%arg0: i32) -> (i32, i32) {
    %c0_i32 = arith.constant 0 : i32
    %c0_i32_0 = arith.constant 0 : i32
    %c0_i32_1 = arith.constant 0 : i32
    return %c0_i32, %c0_i32_0 : i32, i32
  }
  func.func @transform_4(%arg0: i32) -> (i32, i32) {
    %c0_i32 = arith.constant 0 : i32
    %c0_i32_0 = arith.constant 0 : i32
    %c0_i32_1 = arith.constant 0 : i32
    return %c0_i32, %c0_i32_0 : i32, i32
  }
  func.func @transform_5(%arg0: i32) -> (i32, i32) {
    %c0_i32 = arith.constant 0 : i32
    %c0_i32_0 = arith.constant 0 : i32
    %c0_i32_1 = arith.constant 0 : i32
    return %c0_i32, %c0_i32_0 : i32, i32
  }
  func.func @transform_6(%arg0: i32) -> (i32, i32) {
    %c0_i32 = arith.constant 0 : i32
    %c0_i32_0 = arith.constant 0 : i32
    %c0_i32_1 = arith.constant 0 : i32
    return %c0_i32, %c0_i32_0 : i32, i32
  }
  func.func @transform_7(%arg0: i32) -> (i32, i32) {
    %c0_i32 = arith.constant 0 : i32
    %c0_i32_0 = arith.constant 0 : i32
    %c0_i32_1 = arith.constant 0 : i32
    return %c0_i32, %c0_i32_0 : i32, i32
  }
  func.func @transform_8(%arg0: i32) -> (i32, i32) {
    %c0_i32 = arith.constant 0 : i32
    %c0_i32_0 = arith.constant 0 : i32
    %c0_i32_1 = arith.constant 0 : i32
    return %c0_i32, %c0_i32_0 : i32, i32
  }
  func.func @transform_9(%arg0: i32) -> (i32, i32) {
    %c0_i32 = arith.constant 0 : i32
    %c0_i32_0 = arith.constant 0 : i32
    %c0_i32_1 = arith.constant 0 : i32
    return %c0_i32, %c0_i32_0 : i32, i32
  }
  func.func @transform_10(%arg0: i32) -> (i32, i32) {
    %c0_i32 = arith.constant 0 : i32
    %c0_i32_0 = arith.constant 0 : i32
    %c0_i32_1 = arith.constant 0 : i32
    return %c0_i32, %c0_i32_0 : i32, i32
  }
  func.func @transform_11(%arg0: i32) -> (i32, i32) {
    %c0_i32 = arith.constant 0 : i32
    %c0_i32_0 = arith.constant 0 : i32
    return %c0_i32, %arg0 : i32, i32
  }
}

</mosaic_0001>

<llo_original>
// kernel: tpu_custom_call.1
$region0: #{tpu_custom_call.1}
  #allocation0 [shape = 'u32[]', space=smem, size = 0x4, offset = 0x4, fixed_abs, tag = 'smem constant byte address 0x4 - core index']
  #allocation1 [shape = 'u32[144,128]{1,0:T(1,128)}', space=vmem, size = 0x12000, scoped, tag = 'internal scratch']
  #allocation2 [shape = 'f32[1,1]{1,0:T(1,128)S(1)}', space=vmem, size = 0x200, scoped, tag = 'scoped memory for tpu_custom_call.1']
  %s0 = inlined_call_operand.vmem [shape: f32[4,128], index: 0, kind: input, shape index: {}]
  %s1 = inlined_call_operand.vmem [shape: s32[1,128], index: 1, kind: input, shape index: {}]
  %s2 = inlined_call_operand.vmem [shape: s32[1,128], index: 2, kind: input, shape index: {}]
  %s3 = inlined_call_operand.vmem [shape: f32[64,4], index: 3, kind: input, shape index: {}]
  %s4 = inlined_call_operand.vmem [shape: f32[64,10], index: 4, kind: input, shape index: {}]
  %s5 = inlined_call_operand.vmem [shape: f32[64,6], index: 5, kind: input, shape index: {}]
  %s6 = inlined_call_operand.vmem [shape: f32[64,1], index: 6, kind: input, shape index: {}]
  %s7 = inlined_call_operand.vmem [shape: f32[32,64], index: 7, kind: input, shape index: {}]
  %s8 = inlined_call_operand.vmem [shape: f32[32,1], index: 8, kind: input, shape index: {}]
  %s9 = inlined_call_operand.vmem [shape: f32[32,1], index: 9, kind: input, shape index: {}]
  %s10 = inlined_call_operand.<no memory space> [shape: f32[1,1], index: 10, kind: input, shape index: {}]
  %s11 = inlined_call_operand.hbm [shape: f32[1,128], index: 11, kind: output, shape index: {}]
  %s12 = sld [smem:[#allocation0]]
  $region54: #{tpu_custom_call.1} parent=0
    _
  %s14 = ssub.s32 1, %s12
  %s15 = scalar_select 0, %s14, %s12
  %v16 = vstv %s10
  %17 = vst [vmem:[#allocation2] sm:$0x1] %v16
  $region1: #{tpu_custom_call.1} parent=0
    #allocation3 [shape = 'u8[512]{0}', space=vmem, size = 0x400, scoped, tag = 'output window, operand 0, single buffered']
    #allocation4 [shape = 's32[1]{0}', space=sflag, size = 0x4, scoped, tag = 'scoped memory for tpu_custom_call.1']
    %18 = vsyncpa [#allocation4], 0
    // Predicated region
    $region2: #{tpu_custom_call.1} parent=1 // pred_check
      _
    $region3: #{tpu_custom_call.1} parent=1 // pred_check_branch
      %20 = sbr.rel (0) target = $region5
    $region4: #{tpu_custom_call.1} parent=1 // pred_region
      _
    $region5: #{tpu_custom_call.1} parent=1 // pred_fallthru
      _
    // Predicated region
    $region6: #{tpu_custom_call.1} parent=1 // pred_check
      _
    $region7: #{tpu_custom_call.1} parent=1 // pred_check_branch
      %22 = sbr.rel (0) target = $region9
    $region8: #{tpu_custom_call.1} parent=1 // pred_region
      _
    $region9: #{tpu_custom_call.1} parent=1 // pred_fallthru
      _
    // Predicated region
    $region10: #{tpu_custom_call.1} parent=1 // pred_check
      _
    $region11: #{tpu_custom_call.1} parent=1 // pred_check_branch
      %24 = sbr.rel (0) target = $region13
    $region12: #{tpu_custom_call.1} parent=1 // pred_region
      _
    $region13: #{tpu_custom_call.1} parent=1 // pred_fallthru
      _
    // Predicated region
    $region14: #{tpu_custom_call.1} parent=1 // pred_check
      _
    $region15: #{tpu_custom_call.1} parent=1 // pred_check_branch
      %26 = sbr.rel (0) target = $region17
    $region16: #{tpu_custom_call.1} parent=1 // pred_region
      _
    $region17: #{tpu_custom_call.1} parent=1 // pred_fallthru
      _
    // Predicated region
    $region18: #{tpu_custom_call.1} parent=1 // pred_check
      _
    $region19: #{tpu_custom_call.1} parent=1 // pred_check_branch
      %28 = sbr.rel (0) target = $region21
    $region20: #{tpu_custom_call.1} parent=1 // pred_region
      _
    $region21: #{tpu_custom_call.1} parent=1 // pred_fallthru
      _
    // Predicated region
    $region22: #{tpu_custom_call.1} parent=1 // pred_check
      _
    $region23: #{tpu_custom_call.1} parent=1 // pred_check_branch
      %30 = sbr.rel (0) target = $region25
    $region24: #{tpu_custom_call.1} parent=1 // pred_region
      _
    $region25: #{tpu_custom_call.1} parent=1 // pred_fallthru
      _
    // Predicated region
    $region26: #{tpu_custom_call.1} parent=1 // pred_check
      _
    $region27: #{tpu_custom_call.1} parent=1 // pred_check_branch
      %32 = sbr.rel (0) target = $region29
    $region28: #{tpu_custom_call.1} parent=1 // pred_region
      _
    $region29: #{tpu_custom_call.1} parent=1 // pred_fallthru
      _
    // Predicated region
    $region30: #{tpu_custom_call.1} parent=1 // pred_check
      _
    $region31: #{tpu_custom_call.1} parent=1 // pred_check_branch
      %34 = sbr.rel (0) target = $region33
    $region32: #{tpu_custom_call.1} parent=1 // pred_region
      _
    $region33: #{tpu_custom_call.1} parent=1 // pred_fallthru
      _
    // Predicated region
    $region34: #{tpu_custom_call.1} parent=1 // pred_check
      _
    $region35: #{tpu_custom_call.1} parent=1 // pred_check_branch
      %36 = sbr.rel (0) target = $region37
    $region36: #{tpu_custom_call.1} parent=1 // pred_region
      _
    $region37: #{tpu_custom_call.1} parent=1 // pred_fallthru
      _
    // Predicated region
    $region38: #{tpu_custom_call.1} parent=1 // pred_check
      _
    $region39: #{tpu_custom_call.1} parent=1 // pred_check_branch
      %38 = sbr.rel (0) target = $region41
    $region40: #{tpu_custom_call.1} parent=1 // pred_region
      _
    $region41: #{tpu_custom_call.1} parent=1 // pred_fallthru
      _
    // Predicated region
    $region42: #{tpu_custom_call.1} parent=1 // pred_check
      _
    $region43: #{tpu_custom_call.1} parent=1 // pred_check_branch
      %40 = sbr.rel (0) target = $region45
    $region44: #{tpu_custom_call.1} parent=1 // pred_region
      _
    $region45: #{tpu_custom_call.1} parent=1 // pred_fallthru
      _
    %v41 = vld [vmem:[%s0] sm:$0xf]
    %v42 = vld [vmem:[%s1] sm:$0x1]
    %v43 = vld [vmem:[%s2] sm:$0x1]
    %v44 = vlaneseq
    %v45 = vshrl.u32 %v44, 7
    %v46 = vadd.s32 %v45, 8
    %v47 = vlaneseq
    %v48 = vshrl.u32 %v47, 7
    %v49 = vsub.s32 0, %v48
    %v50 = vrot.slane %v42, %v49
    %vm51 = vcmp.eq.s32.totalorder %v45, %v50
    %vm52 = vcmp.eq.s32.totalorder %v46, %v50
    %v53 = vsel %vm51, 1, 0
    %v54 = vsel %vm52, 1, 0
    %v55 = vcvt.s32.f32 %v53
    %v56 = vcvt.s32.f32 %v54
    %v57 = vlaneseq
    %v58 = vshrl.u32 %v57, 7
    %v59 = vsub.s32 0, %v58
    %v60 = vrot.slane %v43, %v59
    %vm61 = vcmp.eq.s32.totalorder %v45, %v60
    %v62 = vsel %vm61, 1, 0
    %v63 = vcvt.s32.f32 %v62
    %v64 = vld [vmem:[%s3] sm:$0xff]
    %v65 = vld [vmem:[%s3 + $0x8] sm:$0xff]
    %v66 = vld [vmem:[%s3 + $0x10] sm:$0xff]
    %v67 = vld [vmem:[%s3 + $0x18] sm:$0xff]
    %v68 = vld [vmem:[%s3 + $0x20] sm:$0xff]
    %v69 = vld [vmem:[%s3 + $0x28] sm:$0xff]
    %v70 = vld [vmem:[%s3 + $0x30] sm:$0xff]
    %v71 = vld [vmem:[%s3 + $0x38] sm:$0xff]
    %v72 = vld [vmem:[%s4] sm:$0xff]
    %v73 = vld [vmem:[%s4 + $0x8] sm:$0xff]
    %v74 = vld [vmem:[%s4 + $0x10] sm:$0xff]
    %v75 = vld [vmem:[%s4 + $0x18] sm:$0xff]
    %v76 = vld [vmem:[%s4 + $0x20] sm:$0xff]
    %v77 = vld [vmem:[%s4 + $0x28] sm:$0xff]
    %v78 = vld [vmem:[%s4 + $0x30] sm:$0xff]
    %v79 = vld [vmem:[%s4 + $0x38] sm:$0xff]
    %vm80 = vcmask 80896
    %v82 = vsel %vm80, %v72, 0
    %v85 = vsel %vm80, %v73, 0
    %v88 = vsel %vm80, %v74, 0
    %v91 = vsel %vm80, %v75, 0
    %v94 = vsel %vm80, %v76, 0
    %v97 = vsel %vm80, %v77, 0
    %v100 = vsel %vm80, %v78, 0
    %v103 = vsel %vm80, %v79, 0
    %vm105 = vcmask 1041408
    %v107 = vsel %vm105, %v56, 0
    %109 = vmatprep.subr.mxu0 0.0
    %110 = vmatpush1.msra.mxu0 0.0
    %111 = vmatprep.subr.mxu0 0.0
    %112 = vmatpush1.msra.mxu0 0.0
    %113 = vmatprep.subr.mxu0 0.0
    %114 = vmatpush1.msra.mxu0 0.0
    %115 = vmatprep.subr.mxu0 0.0
    %116 = vmatpush1.msra.mxu0 0.0
    %117 = vmatprep.subr.mxu0 0.0
    %118 = vmatpush1.msra.mxu0 0.0
    %119 = vmatprep.subr.mxu0 0.0
    %120 = vmatpush1.msra.mxu0 0.0
    %121 = vmatprep.subr.mxu0 0.0
    %122 = vmatpush1.msra.mxu0 0.0
    %123 = vmatprep.subr.mxu0 0.0
    %124 = vmatpush1.msra.mxu0 0.0
    %125 = vmatprep.subr.mxu0 0.0
    %126 = vmatpush1.msra.mxu0 0.0
    %127 = vmatprep.subr.mxu0 0.0
    %128 = vmatpush1.msra.mxu0 0.0
    %129 = vmatprep.subr.mxu0 0.0
    %130 = vmatpush1.msra.mxu0 0.0
    %131 = vmatprep.subr.mxu0 0.0
    %132 = vmatpush1.msra.mxu0 0.0
    %133 = vmatprep.subr.mxu0 0.0
    %134 = vmatpush1.msra.mxu0 0.0
    %135 = vmatprep.subr.mxu0 0.0
    %136 = vmatpush1.msra.mxu0 0.0
    %137 = vmatprep.subr.mxu0 0.0
    %138 = vmatpush1.msra.mxu0 %v107
    %139 = vmatprep.subr.mxu0 0.0
    %140 = vmatpush1.msra.mxu0 %v55
    %141 = vmatprep.subr.mxu0 0.0
    %142 = vmatpush2.msra.mxu0 0.0
    %143 = vmatprep.subr.mxu0 0.0
    %144 = vmatpush2.msra.mxu0 0.0
    %145 = vmatprep.subr.mxu0 0.0
    %146 = vmatpush2.msra.mxu0 0.0
    %147 = vmatprep.subr.mxu0 0.0
    %148 = vmatpush2.msra.mxu0 0.0
    %149 = vmatprep.subr.mxu0 0.0
    %150 = vmatpush2.msra.mxu0 0.0
    %151 = vmatprep.subr.mxu0 0.0
    %152 = vmatpush2.msra.mxu0 0.0
    %153 = vmatprep.subr.mxu0 0.0
    %154 = vmatpush2.msra.mxu0 0.0
    %155 = vmatprep.subr.mxu0 0.0
    %156 = vmatpush2.msra.mxu0 0.0
    %157 = vmatprep.subr.mxu0 0.0
    %158 = vmatpush2.msra.mxu0 0.0
    %159 = vmatprep.subr.mxu0 0.0
    %160 = vmatpush2.msra.mxu0 0.0
    %161 = vmatprep.subr.mxu0 0.0
    %162 = vmatpush2.msra.mxu0 0.0
    %163 = vmatprep.subr.mxu0 0.0
    %164 = vmatpush2.msra.mxu0 0.0
    %165 = vmatprep.subr.mxu0 0.0
    %166 = vmatpush2.msra.mxu0 0.0
    %167 = vmatprep.subr.mxu0 0.0
    %168 = vmatpush2.msra.mxu0 0.0
    %169 = vmatprep.subr.mxu0 0.0
    %170 = vmatpush2.msra.mxu0 0.0
    %171 = vmatprep.subr.mxu0 0.0
    %172 = vmatpush2.msra.mxu0 0.0
    %173 = vmatprep.mubr.f32.mxu0 0.0
    %174 = vmatmul.mubr.f32.gmra.mxu0 %v82
    %v175 = vpop.f32.mrf.mxu0
    %v176 = vadd.f32 0.0, %v175
    %v177 = vpop.f32.mrf.mxu0
    %178 = vmatprep.mubr.f32.mxu0 0.0
    %179 = vmatmul.mubr.f32.gmra.mxu0 %v85
    %v180 = vpop.f32.mrf.mxu0
    %v181 = vadd.f32 0.0, %v180
    %v182 = vpop.f32.mrf.mxu0
    %183 = vmatprep.mubr.f32.mxu0 0.0
    %184 = vmatmul.mubr.f32.gmra.mxu0 %v88
    %v185 = vpop.f32.mrf.mxu0
    %v186 = vadd.f32 0.0, %v185
    %v187 = vpop.f32.mrf.mxu0
    %188 = vmatprep.mubr.f32.mxu0 0.0
    %189 = vmatmul.mubr.f32.gmra.mxu0 %v91
    %v190 = vpop.f32.mrf.mxu0
    %v191 = vadd.f32 0.0, %v190
    %v192 = vpop.f32.mrf.mxu0
    %193 = vmatprep.mubr.f32.mxu0 0.0
    %194 = vmatmul.mubr.f32.gmra.mxu0 %v94
    %v195 = vpop.f32.mrf.mxu0
    %v196 = vadd.f32 0.0, %v195
    %v197 = vpop.f32.mrf.mxu0
    %198 = vmatprep.mubr.f32.mxu0 0.0
    %199 = vmatmul.mubr.f32.gmra.mxu0 %v97
    %v200 = vpop.f32.mrf.mxu0
    %v201 = vadd.f32 0.0, %v200
    %v202 = vpop.f32.mrf.mxu0
    %203 = vmatprep.mubr.f32.mxu0 0.0
    %204 = vmatmul.mubr.f32.gmra.mxu0 %v100
    %v205 = vpop.f32.mrf.mxu0
    %v206 = vadd.f32 0.0, %v205
    %v207 = vpop.f32.mrf.mxu0
    %208 = vmatprep.mubr.f32.mxu0 0.0
    %209 = vmatmul.mubr.f32.gmra.mxu0 %v103
    %v210 = vpop.f32.mrf.mxu0
    %v211 = vadd.f32 0.0, %v210
    %v212 = vpop.f32.mrf.mxu0
    %213 = vdwg.mxu0
    %vm214 = vcmask 31744
    %v216 = vsel %vm214, %v64, 0
    %v219 = vsel %vm214, %v65, 0
    %v222 = vsel %vm214, %v66, 0
    %v225 = vsel %vm214, %v67, 0
    %v228 = vsel %vm214, %v68, 0
    %v231 = vsel %vm214, %v69, 0
    %v234 = vsel %vm214, %v70, 0
    %v237 = vsel %vm214, %v71, 0
    %vm239 = vcmask 1043456
    %v241 = vsel %vm239, %v41, 0
    %243 = vmatprep.subr.mxu0 0.0
    %244 = vmatpush1.msra.mxu0 0.0
    %245 = vmatprep.subr.mxu0 0.0
    %246 = vmatpush1.msra.mxu0 0.0
    %247 = vmatprep.subr.mxu0 0.0
    %248 = vmatpush1.msra.mxu0 0.0
    %249 = vmatprep.subr.mxu0 0.0
    %250 = vmatpush1.msra.mxu0 0.0
    %251 = vmatprep.subr.mxu0 0.0
    %252 = vmatpush1.msra.mxu0 0.0
    %253 = vmatprep.subr.mxu0 0.0
    %254 = vmatpush1.msra.mxu0 0.0
    %255 = vmatprep.subr.mxu0 0.0
    %256 = vmatpush1.msra.mxu0 0.0
    %257 = vmatprep.subr.mxu0 0.0
    %258 = vmatpush1.msra.mxu0 0.0
    %259 = vmatprep.subr.mxu0 0.0
    %260 = vmatpush1.msra.mxu0 0.0
    %261 = vmatprep.subr.mxu0 0.0
    %262 = vmatpush1.msra.mxu0 0.0
    %263 = vmatprep.subr.mxu0 0.0
    %264 = vmatpush1.msra.mxu0 0.0
    %265 = vmatprep.subr.mxu0 0.0
    %266 = vmatpush1.msra.mxu0 0.0
    %267 = vmatprep.subr.mxu0 0.0
    %268 = vmatpush1.msra.mxu0 0.0
    %269 = vmatprep.subr.mxu0 0.0
    %270 = vmatpush1.msra.mxu0 0.0
    %271 = vmatprep.subr.mxu0 0.0
    %272 = vmatpush1.msra.mxu0 0.0
    %273 = vmatprep.subr.mxu0 0.0
    %274 = vmatpush1.msra.mxu0 %v241
    %275 = vmatprep.subr.mxu0 0.0
    %276 = vmatpush2.msra.mxu0 0.0
    %277 = vmatprep.subr.mxu0 0.0
    %278 = vmatpush2.msra.mxu0 0.0
    %279 = vmatprep.subr.mxu0 0.0
    %280 = vmatpush2.msra.mxu0 0.0
    %281 = vmatprep.subr.mxu0 0.0
    %282 = vmatpush2.msra.mxu0 0.0
    %283 = vmatprep.subr.mxu0 0.0
    %284 = vmatpush2.msra.mxu0 0.0
    %285 = vmatprep.subr.mxu0 0.0
    %286 = vmatpush2.msra.mxu0 0.0
    %287 = vmatprep.subr.mxu0 0.0
    %288 = vmatpush2.msra.mxu0 0.0
    %289 = vmatprep.subr.mxu0 0.0
    %290 = vmatpush2.msra.mxu0 0.0
    %291 = vmatprep.subr.mxu0 0.0
    %292 = vmatpush2.msra.mxu0 0.0
    %293 = vmatprep.subr.mxu0 0.0
    %294 = vmatpush2.msra.mxu0 0.0
    %295 = vmatprep.subr.mxu0 0.0
    %296 = vmatpush2.msra.mxu0 0.0
    %297 = vmatprep.subr.mxu0 0.0
    %298 = vmatpush2.msra.mxu0 0.0
    %299 = vmatprep.subr.mxu0 0.0
    %300 = vmatpush2.msra.mxu0 0.0
    %301 = vmatprep.subr.mxu0 0.0
    %302 = vmatpush2.msra.mxu0 0.0
    %303 = vmatprep.subr.mxu0 0.0
    %304 = vmatpush2.msra.mxu0 0.0
    %305 = vmatprep.subr.mxu0 0.0
    %306 = vmatpush2.msra.mxu0 0.0
    %307 = vmatprep.mubr.f32.mxu0 0.0
    %308 = vmatmul.mubr.f32.gmra.mxu0 %v216
    %v309 = vpop.f32.mrf.mxu0
    %v310 = vadd.f32 %v176, %v309
    %v311 = vpop.f32.mrf.mxu0
    %312 = vmatprep.mubr.f32.mxu0 0.0
    %313 = vmatmul.mubr.f32.gmra.mxu0 %v219
    %v314 = vpop.f32.mrf.mxu0
    %v315 = vadd.f32 %v181, %v314
    %v316 = vpop.f32.mrf.mxu0
    %317 = vmatprep.mubr.f32.mxu0 0.0
    %318 = vmatmul.mubr.f32.gmra.mxu0 %v222
    %v319 = vpop.f32.mrf.mxu0
    %v320 = vadd.f32 %v186, %v319
    %v321 = vpop.f32.mrf.mxu0
    %322 = vmatprep.mubr.f32.mxu0 0.0
    %323 = vmatmul.mubr.f32.gmra.mxu0 %v225
    %v324 = vpop.f32.mrf.mxu0
    %v325 = vadd.f32 %v191, %v324
    %v326 = vpop.f32.mrf.mxu0
    %327 = vmatprep.mubr.f32.mxu0 0.0
    %328 = vmatmul.mubr.f32.gmra.mxu0 %v228
    %v329 = vpop.f32.mrf.mxu0
    %v330 = vadd.f32 %v196, %v329
    %v331 = vpop.f32.mrf.mxu0
    %332 = vmatprep.mubr.f32.mxu0 0.0
    %333 = vmatmul.mubr.f32.gmra.mxu0 %v231
    %v334 = vpop.f32.mrf.mxu0
    %v335 = vadd.f32 %v201, %v334
    %v336 = vpop.f32.mrf.mxu0
    %337 = vmatprep.mubr.f32.mxu0 0.0
    %338 = vmatmul.mubr.f32.gmra.mxu0 %v234
    %v339 = vpop.f32.mrf.mxu0
    %v340 = vadd.f32 %v206, %v339
    %v341 = vpop.f32.mrf.mxu0
    %342 = vmatprep.mubr.f32.mxu0 0.0
    %343 = vmatmul.mubr.f32.gmra.mxu0 %v237
    %v344 = vpop.f32.mrf.mxu0
    %v345 = vadd.f32 %v211, %v344
    %v346 = vpop.f32.mrf.mxu0
    %347 = vdwg.mxu0
    %v348 = vld [vmem:[%s5] sm:$0xff]
    %v349 = vld [vmem:[%s5 + $0x8] sm:$0xff]
    %v350 = vld [vmem:[%s5 + $0x10] sm:$0xff]
    %v351 = vld [vmem:[%s5 + $0x18] sm:$0xff]
    %v352 = vld [vmem:[%s5 + $0x20] sm:$0xff]
    %v353 = vld [vmem:[%s5 + $0x28] sm:$0xff]
    %v354 = vld [vmem:[%s5 + $0x30] sm:$0xff]
    %v355 = vld [vmem:[%s5 + $0x38] sm:$0xff]
    %vm356 = vcmask 48128
    %v358 = vsel %vm356, %v348, 0
    %v361 = vsel %vm356, %v349, 0
    %v364 = vsel %vm356, %v350, 0
    %v367 = vsel %vm356, %v351, 0
    %v370 = vsel %vm356, %v352, 0
    %v373 = vsel %vm356, %v353, 0
    %v376 = vsel %vm356, %v354, 0
    %v379 = vsel %vm356, %v355, 0
    %vm381 = vcmask 1045504
    %v383 = vsel %vm381, %v63, 0
    %385 = vmatprep.subr.mxu0 0.0
    %386 = vmatpush1.msra.mxu0 0.0
    %387 = vmatprep.subr.mxu0 0.0
    %388 = vmatpush1.msra.mxu0 0.0
    %389 = vmatprep.subr.mxu0 0.0
    %390 = vmatpush1.msra.mxu0 0.0
    %391 = vmatprep.subr.mxu0 0.0
    %392 = vmatpush1.msra.mxu0 0.0
    %393 = vmatprep.subr.mxu0 0.0
    %394 = vmatpush1.msra.mxu0 0.0
    %395 = vmatprep.subr.mxu0 0.0
    %396 = vmatpush1.msra.mxu0 0.0
    %397 = vmatprep.subr.mxu0 0.0
    %398 = vmatpush1.msra.mxu0 0.0
    %399 = vmatprep.subr.mxu0 0.0
    %400 = vmatpush1.msra.mxu0 0.0
    %401 = vmatprep.subr.mxu0 0.0
    %402 = vmatpush1.msra.mxu0 0.0
    %403 = vmatprep.subr.mxu0 0.0
    %404 = vmatpush1.msra.mxu0 0.0
    %405 = vmatprep.subr.mxu0 0.0
    %406 = vmatpush1.msra.mxu0 0.0
    %407 = vmatprep.subr.mxu0 0.0
    %408 = vmatpush1.msra.mxu0 0.0
    %409 = vmatprep.subr.mxu0 0.0
    %410 = vmatpush1.msra.mxu0 0.0
    %411 = vmatprep.subr.mxu0 0.0
    %412 = vmatpush1.msra.mxu0 0.0
    %413 = vmatprep.subr.mxu0 0.0
    %414 = vmatpush1.msra.mxu0 0.0
    %415 = vmatprep.subr.mxu0 0.0
    %416 = vmatpush1.msra.mxu0 %v383
    %417 = vmatprep.subr.mxu0 0.0
    %418 = vmatpush2.msra.mxu0 0.0
    %419 = vmatprep.subr.mxu0 0.0
    %420 = vmatpush2.msra.mxu0 0.0
    %421 = vmatprep.subr.mxu0 0.0
    %422 = vmatpush2.msra.mxu0 0.0
    %423 = vmatprep.subr.mxu0 0.0
    %424 = vmatpush2.msra.mxu0 0.0
    %425 = vmatprep.subr.mxu0 0.0
    %426 = vmatpush2.msra.mxu0 0.0
    %427 = vmatprep.subr.mxu0 0.0
    %428 = vmatpush2.msra.mxu0 0.0
    %429 = vmatprep.subr.mxu0 0.0
    %430 = vmatpush2.msra.mxu0 0.0
    %431 = vmatprep.subr.mxu0 0.0
    %432 = vmatpush2.msra.mxu0 0.0
    %433 = vmatprep.subr.mxu0 0.0
    %434 = vmatpush2.msra.mxu0 0.0
    %435 = vmatprep.subr.mxu0 0.0
    %436 = vmatpush2.msra.mxu0 0.0
    %437 = vmatprep.subr.mxu0 0.0
    %438 = vmatpush2.msra.mxu0 0.0
    %439 = vmatprep.subr.mxu0 0.0
    %440 = vmatpush2.msra.mxu0 0.0
    %441 = vmatprep.subr.mxu0 0.0
    %442 = vmatpush2.msra.mxu0 0.0
    %443 = vmatprep.subr.mxu0 0.0
    %444 = vmatpush2.msra.mxu0 0.0
    %445 = vmatprep.subr.mxu0 0.0
    %446 = vmatpush2.msra.mxu0 0.0
    %447 = vmatprep.subr.mxu0 0.0
    %448 = vmatpush2.msra.mxu0 0.0
    %449 = vmatprep.mubr.f32.mxu0 0.0
    %450 = vmatmul.mubr.f32.gmra.mxu0 %v358
    %v451 = vpop.f32.mrf.mxu0
    %v452 = vadd.f32 0.0, %v451
    %v453 = vpop.f32.mrf.mxu0
    %454 = vmatprep.mubr.f32.mxu0 0.0
    %455 = vmatmul.mubr.f32.gmra.mxu0 %v361
    %v456 = vpop.f32.mrf.mxu0
    %v457 = vadd.f32 0.0, %v456
    %v458 = vpop.f32.mrf.mxu0
    %459 = vmatprep.mubr.f32.mxu0 0.0
    %460 = vmatmul.mubr.f32.gmra.mxu0 %v364
    %v461 = vpop.f32.mrf.mxu0
    %v462 = vadd.f32 0.0, %v461
    %v463 = vpop.f32.mrf.mxu0
    %464 = vmatprep.mubr.f32.mxu0 0.0
    %465 = vmatmul.mubr.f32.gmra.mxu0 %v367
    %v466 = vpop.f32.mrf.mxu0
    %v467 = vadd.f32 0.0, %v466
    %v468 = vpop.f32.mrf.mxu0
    %469 = vmatprep.mubr.f32.mxu0 0.0
    %470 = vmatmul.mubr.f32.gmra.mxu0 %v370
    %v471 = vpop.f32.mrf.mxu0
    %v472 = vadd.f32 0.0, %v471
    %v473 = vpop.f32.mrf.mxu0
    %474 = vmatprep.mubr.f32.mxu0 0.0
    %475 = vmatmul.mubr.f32.gmra.mxu0 %v373
    %v476 = vpop.f32.mrf.mxu0
    %v477 = vadd.f32 0.0, %v476
    %v478 = vpop.f32.mrf.mxu0
    %479 = vmatprep.mubr.f32.mxu0 0.0
    %480 = vmatmul.mubr.f32.gmra.mxu0 %v376
    %v481 = vpop.f32.mrf.mxu0
    %v482 = vadd.f32 0.0, %v481
    %v483 = vpop.f32.mrf.mxu0
    %484 = vmatprep.mubr.f32.mxu0 0.0
    %485 = vmatmul.mubr.f32.gmra.mxu0 %v379
    %v486 = vpop.f32.mrf.mxu0
    %v487 = vadd.f32 0.0, %v486
    %v488 = vpop.f32.mrf.mxu0
    %489 = vdwg.mxu0
    %v490 = vadd.f32 %v310, %v452
    %v491 = vadd.f32 %v315, %v457
    %v492 = vadd.f32 %v320, %v462
    %v493 = vadd.f32 %v325, %v467
    %v494 = vadd.f32 %v330, %v472
    %v495 = vadd.f32 %v335, %v477
    %v496 = vadd.f32 %v340, %v482
    %v497 = vadd.f32 %v345, %v487
    %v498 = vld [vmem:[%s6] sm:$0xff]
    %v499 = vld [vmem:[%s6 + $0x8] sm:$0xff]
    %v500 = vld [vmem:[%s6 + $0x10] sm:$0xff]
    %v501 = vld [vmem:[%s6 + $0x18] sm:$0xff]
    %v502 = vld [vmem:[%s6 + $0x20] sm:$0xff]
    %v503 = vld [vmem:[%s6 + $0x28] sm:$0xff]
    %v504 = vld [vmem:[%s6 + $0x30] sm:$0xff]
    %v505 = vld [vmem:[%s6 + $0x38] sm:$0xff]
    %507 = vset.pattern.permute.xlu0 0
    %508 = vperm.xlu0 %507, %v498
    %v509 = vpop.permute.xlu0 %508
    %512 = vset.pattern.permute.xlu0 0
    %513 = vperm.xlu0 %512, %v499
    %v514 = vpop.permute.xlu0 %513
    %517 = vset.pattern.permute.xlu0 0
    %518 = vperm.xlu0 %517, %v500
    %v519 = vpop.permute.xlu0 %518
    %522 = vset.pattern.permute.xlu0 0
    %523 = vperm.xlu0 %522, %v501
    %v524 = vpop.permute.xlu0 %523
    %527 = vset.pattern.permute.xlu0 0
    %528 = vperm.xlu0 %527, %v502
    %v529 = vpop.permute.xlu0 %528
    %532 = vset.pattern.permute.xlu0 0
    %533 = vperm.xlu0 %532, %v503
    %v534 = vpop.permute.xlu0 %533
    %537 = vset.pattern.permute.xlu0 0
    %538 = vperm.xlu0 %537, %v504
    %v539 = vpop.permute.xlu0 %538
    %542 = vset.pattern.permute.xlu0 0
    %543 = vperm.xlu0 %542, %v505
    %v544 = vpop.permute.xlu0 %543
    %v546 = vadd.f32 %v490, %v509
    %v547 = vadd.f32 %v491, %v514
    %v548 = vadd.f32 %v492, %v519
    %v549 = vadd.f32 %v493, %v524
    %v550 = vadd.f32 %v494, %v529
    %v551 = vadd.f32 %v495, %v534
    %v552 = vadd.f32 %v496, %v539
    %v553 = vadd.f32 %v497, %v544
    %v554 = vmax.f32 %v546, 0.0
    %v555 = vmax.f32 %v547, 0.0
    %v556 = vmax.f32 %v548, 0.0
    %v557 = vmax.f32 %v549, 0.0
    %v558 = vmax.f32 %v550, 0.0
    %v559 = vmax.f32 %v551, 0.0
    %v560 = vmax.f32 %v552, 0.0
    %v561 = vmax.f32 %v553, 0.0
    %v562 = vld [vmem:[%s7] sm:$0xff]
    %v563 = vld [vmem:[%s7 + $0x8] sm:$0xff]
    %v564 = vld [vmem:[%s7 + $0x10] sm:$0xff]
    %v565 = vld [vmem:[%s7 + $0x18] sm:$0xff]
    %v566 = vld [vmem:[%s8] sm:$0xff]
    %v567 = vld [vmem:[%s8 + $0x8] sm:$0xff]
    %v568 = vld [vmem:[%s8 + $0x10] sm:$0xff]
    %v569 = vld [vmem:[%s8 + $0x18] sm:$0xff]
    %571 = vset.pattern.permute.xlu0 0
    %572 = vperm.xlu0 %571, %v566
    %v573 = vpop.permute.xlu0 %572
    %576 = vset.pattern.permute.xlu0 0
    %577 = vperm.xlu0 %576, %v567
    %v578 = vpop.permute.xlu0 %577
    %581 = vset.pattern.permute.xlu0 0
    %582 = vperm.xlu0 %581, %v568
    %v583 = vpop.permute.xlu0 %582
    %586 = vset.pattern.permute.xlu0 0
    %587 = vperm.xlu0 %586, %v569
    %v588 = vpop.permute.xlu0 %587
    %vm590 = vcmask 523264
    %v592 = vsel %vm590, %v562, 0
    %v595 = vsel %vm590, %v563, 0
    %v598 = vsel %vm590, %v564, 0
    %v601 = vsel %vm590, %v565, 0
    %603 = vmatprep.subr.mxu0 0.0
    %604 = vmatpush1.msra.mxu0 0.0
    %605 = vmatprep.subr.mxu0 0.0
    %606 = vmatpush1.msra.mxu0 0.0
    %607 = vmatprep.subr.mxu0 0.0
    %608 = vmatpush1.msra.mxu0 0.0
    %609 = vmatprep.subr.mxu0 0.0
    %610 = vmatpush1.msra.mxu0 0.0
    %611 = vmatprep.subr.mxu0 0.0
    %612 = vmatpush1.msra.mxu0 0.0
    %613 = vmatprep.subr.mxu0 0.0
    %614 = vmatpush1.msra.mxu0 0.0
    %615 = vmatprep.subr.mxu0 0.0
    %616 = vmatpush1.msra.mxu0 0.0
    %617 = vmatprep.subr.mxu0 0.0
    %618 = vmatpush1.msra.mxu0 0.0
    %619 = vmatprep.subr.mxu0 0.0
    %620 = vmatpush1.msra.mxu0 %v561
    %621 = vmatprep.subr.mxu0 0.0
    %622 = vmatpush1.msra.mxu0 %v560
    %623 = vmatprep.subr.mxu0 0.0
    %624 = vmatpush1.msra.mxu0 %v559
    %625 = vmatprep.subr.mxu0 0.0
    %626 = vmatpush1.msra.mxu0 %v558
    %627 = vmatprep.subr.mxu0 0.0
    %628 = vmatpush1.msra.mxu0 %v557
    %629 = vmatprep.subr.mxu0 0.0
    %630 = vmatpush1.msra.mxu0 %v556
    %631 = vmatprep.subr.mxu0 0.0
    %632 = vmatpush1.msra.mxu0 %v555
    %633 = vmatprep.subr.mxu0 0.0
    %634 = vmatpush1.msra.mxu0 %v554
    %635 = vmatprep.subr.mxu0 0.0
    %636 = vmatpush2.msra.mxu0 0.0
    %637 = vmatprep.subr.mxu0 0.0
    %638 = vmatpush2.msra.mxu0 0.0
    %639 = vmatprep.subr.mxu0 0.0
    %640 = vmatpush2.msra.mxu0 0.0
    %641 = vmatprep.subr.mxu0 0.0
    %642 = vmatpush2.msra.mxu0 0.0
    %643 = vmatprep.subr.mxu0 0.0
    %644 = vmatpush2.msra.mxu0 0.0
    %645 = vmatprep.subr.mxu0 0.0
    %646 = vmatpush2.msra.mxu0 0.0
    %647 = vmatprep.subr.mxu0 0.0
    %648 = vmatpush2.msra.mxu0 0.0
    %649 = vmatprep.subr.mxu0 0.0
    %650 = vmatpush2.msra.mxu0 0.0
    %651 = vmatprep.subr.mxu0 0.0
    %652 = vmatpush2.msra.mxu0 0.0
    %653 = vmatprep.subr.mxu0 0.0
    %654 = vmatpush2.msra.mxu0 0.0
    %655 = vmatprep.subr.mxu0 0.0
    %656 = vmatpush2.msra.mxu0 0.0
    %657 = vmatprep.subr.mxu0 0.0
    %658 = vmatpush2.msra.mxu0 0.0
    %659 = vmatprep.subr.mxu0 0.0
    %660 = vmatpush2.msra.mxu0 0.0
    %661 = vmatprep.subr.mxu0 0.0
    %662 = vmatpush2.msra.mxu0 0.0
    %663 = vmatprep.subr.mxu0 0.0
    %664 = vmatpush2.msra.mxu0 0.0
    %665 = vmatprep.subr.mxu0 0.0
    %666 = vmatpush2.msra.mxu0 0.0
    %667 = vmatprep.mubr.f32.mxu0 0.0
    %668 = vmatmul.mubr.f32.gmra.mxu0 %v592
    %v669 = vpop.f32.mrf.mxu0
    %v670 = vadd.f32 %v573, %v669
    %v671 = vpop.f32.mrf.mxu0
    %672 = vmatprep.mubr.f32.mxu0 0.0
    %673 = vmatmul.mubr.f32.gmra.mxu0 %v595
    %v674 = vpop.f32.mrf.mxu0
    %v675 = vadd.f32 %v578, %v674
    %v676 = vpop.f32.mrf.mxu0
    %677 = vmatprep.mubr.f32.mxu0 0.0
    %678 = vmatmul.mubr.f32.gmra.mxu0 %v598
    %v679 = vpop.f32.mrf.mxu0
    %v680 = vadd.f32 %v583, %v679
    %v681 = vpop.f32.mrf.mxu0
    %682 = vmatprep.mubr.f32.mxu0 0.0
    %683 = vmatmul.mubr.f32.gmra.mxu0 %v601
    %v684 = vpop.f32.mrf.mxu0
    %v685 = vadd.f32 %v588, %v684
    %v686 = vpop.f32.mrf.mxu0
    %687 = vdwg.mxu0
    %v688 = vmax.f32 %v670, 0.0
    %v689 = vmax.f32 %v675, 0.0
    %v690 = vmax.f32 %v680, 0.0
    %v691 = vmax.f32 %v685, 0.0
    %v692 = vld [vmem:[%s9] sm:$0xff]
    %v693 = vld [vmem:[%s9 + $0x8] sm:$0xff]
    %v694 = vld [vmem:[%s9 + $0x10] sm:$0xff]
    %v695 = vld [vmem:[%s9 + $0x18] sm:$0xff]
    %697 = vset.pattern.permute.xlu0 0
    %698 = vperm.xlu0 %697, %v692
    %v699 = vpop.permute.xlu0 %698
    %702 = vset.pattern.permute.xlu0 0
    %703 = vperm.xlu0 %702, %v693
    %v704 = vpop.permute.xlu0 %703
    %707 = vset.pattern.permute.xlu0 0
    %708 = vperm.xlu0 %707, %v694
    %v709 = vpop.permute.xlu0 %708
    %712 = vset.pattern.permute.xlu0 0
    %713 = vperm.xlu0 %712, %v695
    %v714 = vpop.permute.xlu0 %713
    %v716 = vmul.f32 %v688, %v699
    %v717 = vmul.f32 %v689, %v704
    %v718 = vmul.f32 %v690, %v709
    %v719 = vmul.f32 %v691, %v714
    %v720 = vadd.f32 %v716, %v717
    %v721 = vadd.f32 %v720, %v718
    %v722 = vadd.f32 %v721, %v719
    %v723 = vrot.slane %v722, 4
    %v724 = vadd.f32 %v722, %v723
    %v725 = vrot.slane %v724, 2
    %v726 = vadd.f32 %v724, %v725
    %v727 = vrot.slane %v726, 1
    %v728 = vadd.f32 %v726, %v727
    %v729 = vld [vmem:[#allocation2] sm:$0x1]
    %731 = vset.pattern.permute.xlu0 0
    %732 = vperm.xlu0 %731, %v729
    %v733 = vpop.permute.xlu0 %732
    %v735 = vlaneseq
    %v736 = vshrl.u32 %v735, 7
    %v737 = vsub.s32 0, %v736
    %v738 = vrot.slane %v733, %v737
    %v739 = vadd.f32 %v728, %v738
    %v740 = vxor.u32 %v739, 2147483648
    %v741 = vmul.f32 %v740, 1.442695
    %v742 = vpow.pop %v741
    %v743 = vadd.f32 %v742, 1.0
    %v744 = vrcp.pop %v743
    %v745 = vmul.f32 1.0, %v744
    %746 = vst [vmem:[#allocation3] sm:$0x1] %v745
    // Predicated region
    $region46: #{tpu_custom_call.1} parent=1 // pred_check
      _
    $region47: #{tpu_custom_call.1} parent=1 // pred_check_branch
      %748 = sbr.rel (0) target = $region49
    $region48: #{tpu_custom_call.1} parent=1 // pred_region
      %s750 = ssub.s32 16, 16
      %751 = vsyncadd [#allocation4], %s750
      %s753 = sshll.u32 [#allocation3], 4
      %s754 = int_to_ptr.vmem [resolvable:$true] %s753
      %756 = dma.vmem_to_hbm [thread:$0]  %s754, 16, %s11, [#allocation4]
    $region49: #{tpu_custom_call.1} parent=1 // pred_fallthru
      _
    // Predicated region
    $region50: #{tpu_custom_call.1} parent=1 // pred_check
      _
    $region51: #{tpu_custom_call.1} parent=1 // pred_check_branch
      %758 = sbr.rel (0) target = $region53
    $region52: #{tpu_custom_call.1} parent=1 // pred_region
      %759 = dma.done [#allocation4], 16
    $region53: #{tpu_custom_call.1} parent=1 // pred_fallthru
      _
    %760 = vsyncpa [#allocation4], 1

</llo_original>
